<compile_context>
chip_gen: v6e
topology: v6e:2x2x1
jax: 0.10.0
libtpu: 0.0.40
codegen_flags: <defaults>
</compile_context>

<pallas_src>
import jax
import jax.numpy as jnp
from jax.experimental import pallas as pl
from jax.experimental.pallas import tpu as pltpu


# ---------------------------------------------------------------------------
# Pallas kernel: fused 3-layer MLP on one (TB, .) batch tile.
# ---------------------------------------------------------------------------
def mlp_kernel(x_ref, c_ref, w0x_ref, w0c_ref, b0_ref,
               w1_ref, b1_ref, w2_ref, b2_ref, o_ref):
    def lrelu(h):  # act_h='lrlu' -> nn.LeakyReLU(0.1)
        return jnp.where(h >= 0, h, 0.1 * h)

    # input block: x @ W0x + ctxt @ W0c  (== concat(x, ctxt) @ W0) + b0, lrelu.
    # The concat is folded into split weights so no extra HBM pass is needed.
    h = jnp.dot(x_ref[...].astype(jnp.bfloat16), w0x_ref[...],
                preferred_element_type=jnp.float32)
    h = h + jnp.dot(c_ref[...].astype(jnp.bfloat16), w0c_ref[...],
                    preferred_element_type=jnp.float32)
    h = lrelu(h + b0_ref[...])                      # f32 VPU math (v5e-safe)

    # hidden block
    h = jnp.dot(h.astype(jnp.bfloat16), w1_ref[...],
                preferred_element_type=jnp.float32)
    h = lrelu(h + b1_ref[...])

    # output block (act_o='none')
    out = jnp.dot(h.astype(jnp.bfloat16), w2_ref[...],
                  preferred_element_type=jnp.float32)
    o_ref[...] = (out + b2_ref[...]).astype(o_ref.dtype)


# ---------------------------------------------------------------------------
# Batch-tile selection: large tiles (amortize ~0.35us/step), >=2 grid steps
# when possible (v7x megacore), tile rows a multiple of 16 when tb < B.
# ---------------------------------------------------------------------------
def _pick_tb(batch, tb_req):
    tb = max(8, min(int(tb_req), batch))
    if tb >= batch and batch >= 32:
        tb = -(-batch // 2)                 # ceil(B/2): keep >=2 parallel steps
    if tb < batch:
        tb = max(16, (tb // 16) * 16)       # f32 sublanes + in-kernel bf16 pack
    return min(tb, batch)


def mlp_forward(x, ctxt, params, *, tb=8192, out_dtype=jnp.float32):
    """Fused MLP forward: x (B,Din) f32, ctxt (B,Dc) f32 -> (B,Dout)."""
    B, din = x.shape
    dc = ctxt.shape[1]
    hddn = params["w1"].shape[0]
    dout = params["w2"].shape[1]

    tb = _pick_tb(B, tb)
    grid = (pl.cdiv(B, tb),)

    row = lambda width: pl.BlockSpec((tb, width), lambda i: (i, 0))
    resident = lambda shape: pl.BlockSpec(shape, lambda i: (0, 0))  # stays in VMEM

    out_bytes = jnp.dtype(out_dtype).itemsize
    weight_bytes = 2 * ((din + dc) * hddn + hddn * hddn + hddn * dout) \
        + 4 * (2 * hddn + dout)
    flops = 2 * B * ((din + dc) * hddn + hddn * hddn + hddn * dout)
    bytes_accessed = B * (din + dc) * 4 + B * dout * out_bytes + weight_bytes

    # Per-step VMEM: double-buffered activation streams + f32/bf16 hidden temps
    # + (double-buffered) resident weights + slack.  Clamped so large tiles
    # still fit v7x's 64 MiB physical VMEM.
    stream_bytes = 2 * tb * (4 * (din + dc) + out_bytes * dout)
    temp_bytes = 6 * tb * hddn * 4
    vmem_needed = stream_bytes + temp_bytes + 2 * weight_bytes + (2 << 20)
    vmem_limit = int(min(max(vmem_needed, 16 << 20), 48 << 20))

    return pl.pallas_call(
        mlp_kernel,
        out_shape=jax.ShapeDtypeStruct((B, dout), out_dtype),
        grid=grid,
        in_specs=[
            row(din),                       # x
            row(dc),                        # ctxt
            resident((din, hddn)),          # w0x
            resident((dc, hddn)),           # w0c
            resident((1, hddn)),            # b0
            resident((hddn, hddn)),         # w1
            resident((1, hddn)),            # b1
            resident((hddn, dout)),         # w2
            resident((1, dout)),            # b2
        ],
        out_specs=row(dout),
        compiler_params=pltpu.CompilerParams(
            dimension_semantics=("parallel",),   # megacore-shardable batch axis
            vmem_limit_bytes=vmem_limit,
        ),
        cost_estimate=pl.CostEstimate(
            flops=flops, transcendentals=0, bytes_accessed=bytes_accessed),
    )(x, ctxt,
      params["w0x"], params["w0c"], params["b0"],
      params["w1"], params["b1"],
      params["w2"], params["b2"])


# ---------------------------------------------------------------------------
# Deterministic parameter construction (synthetic weights, no checkpoint).
# Input-block weight is stored split by source (x rows / ctxt rows) so the
# kernel never needs a concatenated activation.  Weights bf16, biases f32.
# ---------------------------------------------------------------------------
def make_params(key, inpt_dim, ctxt_dim, hddn_dim, outp_dim):
    k0, k1, k2, k3, k4, k5 = jax.random.split(key, 6)
    d0 = inpt_dim + ctxt_dim
    scale = lambda fan_in: 1.0 / jnp.sqrt(jnp.float32(fan_in))
    w0 = jax.random.normal(k0, (d0, hddn_dim), jnp.float32) * scale(d0)
    b0 = jax.random.normal(k1, (1, hddn_dim), jnp.float32) * 0.01
    w1 = jax.random.normal(k2, (hddn_dim, hddn_dim), jnp.float32) * scale(hddn_dim)
    b1 = jax.random.normal(k3, (1, hddn_dim), jnp.float32) * 0.01
    w2 = jax.random.normal(k4, (hddn_dim, outp_dim), jnp.float32) * scale(hddn_dim)
    b2 = jax.random.normal(k5, (1, outp_dim), jnp.float32) * 0.01
    return {
        "w0x": w0[:inpt_dim].astype(jnp.bfloat16),
        "w0c": w0[inpt_dim:].astype(jnp.bfloat16),
        "b0": b0,
        "w1": w1.astype(jnp.bfloat16), "b1": b1,
        "w2": w2.astype(jnp.bfloat16), "b2": b2,
    }


def mlp_reference(x, ctxt, params, *, bf16_mxu=True):
    """Pure-JAX reference matching the PyTorch forward semantics.

    bf16_mxu=True mirrors the kernel's operand-dtype strategy exactly (tight
    comparison); False is the plain fp32 forward (PyTorch semantics).
    """
    lrelu = lambda h: jnp.where(h >= 0, h, 0.1 * h)
    mxu_dt = jnp.bfloat16 if bf16_mxu else jnp.float32
    w0x = params["w0x"].astype(mxu_dt)
    w0c = params["w0c"].astype(mxu_dt)
    w1 = params["w1"].astype(mxu_dt)
    w2 = params["w2"].astype(mxu_dt)
    h = (jnp.dot(x.astype(mxu_dt), w0x, preferred_element_type=jnp.float32)
         + jnp.dot(ctxt.astype(mxu_dt), w0c, preferred_element_type=jnp.float32))
    h = lrelu(h + params["b0"])
    h = lrelu(jnp.dot(h.astype(mxu_dt), w1,
                      preferred_element_type=jnp.float32) + params["b1"])
    return jnp.dot(h.astype(mxu_dt), w2,
                   preferred_element_type=jnp.float32) + params["b2"]


if __name__ == "__main__":
    # MLP(inpt_dim=16, outp_dim=8, ctxt_dim=4, hddn_dim=32, num_blocks=2,
    #     act_h='lrlu', act_o='none', ctxt_in_inpt=True)  -> 16(4)>32>32>8
    B, INPT, CTXT, HDDN, OUTP = 256, 16, 4, 32, 8

    key = jax.random.PRNGKey(0)
    kx, kc, kp = jax.random.split(key, 3)
    x = jax.random.normal(kx, (B, INPT), jnp.float32)
    ctxt = jax.random.normal(kc, (B, CTXT), jnp.float32)
    params = make_params(kp, INPT, CTXT, HDDN, OUTP)

    # Default tb picker -> 2 grid steps of 128 rows at this demo size.
    out = mlp_forward(x, ctxt, params)
    out = jax.block_until_ready(out)
    assert out.shape == (B, OUTP) and out.dtype == jnp.float32

    # Tight check against a reference using the same bf16-operand strategy.
    ref_bf16 = mlp_reference(x, ctxt, params, bf16_mxu=True)
    assert jnp.allclose(out, ref_bf16, atol=1e-3, rtol=1e-3)

    # Loose check against the plain fp32 forward (PyTorch semantics);
    # differences are only bf16 operand rounding.
    ref_f32 = mlp_reference(x, ctxt, params, bf16_mxu=False)
    assert jnp.allclose(out, ref_f32, atol=5e-2, rtol=5e-2)

    print("KERNEL_OK")
</pallas_src>

<mosaic_0001>
module attributes {stable_mosaic.version = 11 : i64} {
  func.func @mlp_kernel(%arg0: i32, %arg1: memref<128x16xf32, #tpu.memory_space<vmem>>, %arg2: memref<128x4xf32, #tpu.memory_space<vmem>>, %arg3: memref<16x32xbf16, #tpu.memory_space<vmem>>, %arg4: memref<4x32xbf16, #tpu.memory_space<vmem>>, %arg5: memref<1x32xf32, #tpu.memory_space<vmem>>, %arg6: memref<32x32xbf16, #tpu.memory_space<vmem>>, %arg7: memref<1x32xf32, #tpu.memory_space<vmem>>, %arg8: memref<32x8xbf16, #tpu.memory_space<vmem>>, %arg9: memref<1x8xf32, #tpu.memory_space<vmem>>, %arg10: memref<128x8xf32, #tpu.memory_space<vmem>>) attributes {dimension_semantics = [#tpu.dimension_semantics<parallel>], iteration_bounds = array<i64: 2>, scalar_prefetch = 0 : i64, scratch_operands = 0 : i64, tpu.core_type = #tpu.core_type<tc>, window_params = [{transform_indices = @transform_0, window_bounds = array<i64: 128, 16>}, {transform_indices = @transform_1, window_bounds = array<i64: 128, 4>}, {pipeline_mode = #tpu.pipeline_mode<synchronous>, transform_indices = @transform_2, window_bounds = array<i64: 16, 32>}, {pipeline_mode = #tpu.pipeline_mode<synchronous>, transform_indices = @transform_3, window_bounds = array<i64: 4, 32>}, {pipeline_mode = #tpu.pipeline_mode<synchronous>, transform_indices = @transform_4, window_bounds = array<i64: 1, 32>}, {pipeline_mode = #tpu.pipeline_mode<synchronous>, transform_indices = @transform_5, window_bounds = array<i64: 32, 32>}, {pipeline_mode = #tpu.pipeline_mode<synchronous>, transform_indices = @transform_6, window_bounds = array<i64: 1, 32>}, {pipeline_mode = #tpu.pipeline_mode<synchronous>, transform_indices = @transform_7, window_bounds = array<i64: 32, 8>}, {pipeline_mode = #tpu.pipeline_mode<synchronous>, transform_indices = @transform_8, window_bounds = array<i64: 1, 8>}, {transform_indices = @transform_9, window_bounds = array<i64: 128, 8>}]} {
    %c0 = arith.constant 0 : index
    %c0_0 = arith.constant 0 : index
    %0 = vector.load %arg1[%c0, %c0_0] : memref<128x16xf32, #tpu.memory_space<vmem>>, vector<128x16xf32>
    %1 = arith.truncf %0 : vector<128x16xf32> to vector<128x16xbf16>
    %c0_1 = arith.constant 0 : index
    %c0_2 = arith.constant 0 : index
    %2 = vector.load %arg3[%c0_1, %c0_2] : memref<16x32xbf16, #tpu.memory_space<vmem>>, vector<16x32xbf16>
    %cst = arith.constant dense<0.000000e+00> : vector<128x32xf32>
    %3 = tpu.matmul %1, %2, %cst {dimension_numbers = #tpu.dot_dimension_numbers<[1], [0], [0], [1], [0, 0, 1, 1], [], []>} : vector<128x16xbf16>, vector<16x32xbf16>, vector<128x32xf32> -> vector<128x32xf32>
    %c0_3 = arith.constant 0 : index
    %c0_4 = arith.constant 0 : index
    %4 = vector.load %arg2[%c0_3, %c0_4] : memref<128x4xf32, #tpu.memory_space<vmem>>, vector<128x4xf32>
    %5 = arith.truncf %4 : vector<128x4xf32> to vector<128x4xbf16>
    %c0_5 = arith.constant 0 : index
    %c0_6 = arith.constant 0 : index
    %6 = vector.load %arg4[%c0_5, %c0_6] : memref<4x32xbf16, #tpu.memory_space<vmem>>, vector<4x32xbf16>
    %cst_7 = arith.constant dense<0.000000e+00> : vector<128x32xf32>
    %7 = tpu.matmul %5, %6, %cst_7 {dimension_numbers = #tpu.dot_dimension_numbers<[1], [0], [0], [1], [0, 0, 1, 1], [], []>} : vector<128x4xbf16>, vector<4x32xbf16>, vector<128x32xf32> -> vector<128x32xf32>
    %8 = arith.addf %3, %7 : vector<128x32xf32>
    %c0_8 = arith.constant 0 : index
    %c0_9 = arith.constant 0 : index
    %9 = vector.load %arg5[%c0_8, %c0_9] : memref<1x32xf32, #tpu.memory_space<vmem>>, vector<1x32xf32>
    %10 = vector.broadcast %9 : vector<1x32xf32> to vector<128x32xf32>
    %11 = arith.addf %8, %10 : vector<128x32xf32>
    %cst_10 = arith.constant 0.000000e+00 : f32
    %12 = vector.broadcast %cst_10 : f32 to vector<128x32xf32>
    %13 = arith.cmpf oge, %11, %12 : vector<128x32xf32>
    %cst_11 = arith.constant 1.000000e-01 : f32
    %14 = vector.broadcast %cst_11 : f32 to vector<128x32xf32>
    %15 = arith.mulf %14, %11 : vector<128x32xf32>
    %16 = arith.select %13, %11, %15 : vector<128x32xi1>, vector<128x32xf32>
    %17 = arith.truncf %16 : vector<128x32xf32> to vector<128x32xbf16>
    %c0_12 = arith.constant 0 : index
    %c0_13 = arith.constant 0 : index
    %18 = vector.load %arg6[%c0_12, %c0_13] : memref<32x32xbf16, #tpu.memory_space<vmem>>, vector<32x32xbf16>
    %cst_14 = arith.constant dense<0.000000e+00> : vector<128x32xf32>
    %19 = tpu.matmul %17, %18, %cst_14 {dimension_numbers = #tpu.dot_dimension_numbers<[1], [0], [0], [1], [0, 0, 1, 1], [], []>} : vector<128x32xbf16>, vector<32x32xbf16>, vector<128x32xf32> -> vector<128x32xf32>
    %c0_15 = arith.constant 0 : index
    %c0_16 = arith.constant 0 : index
    %20 = vector.load %arg7[%c0_15, %c0_16] : memref<1x32xf32, #tpu.memory_space<vmem>>, vector<1x32xf32>
    %21 = vector.broadcast %20 : vector<1x32xf32> to vector<128x32xf32>
    %22 = arith.addf %19, %21 : vector<128x32xf32>
    %cst_17 = arith.constant 0.000000e+00 : f32
    %23 = vector.broadcast %cst_17 : f32 to vector<128x32xf32>
    %24 = arith.cmpf oge, %22, %23 : vector<128x32xf32>
    %cst_18 = arith.constant 1.000000e-01 : f32
    %25 = vector.broadcast %cst_18 : f32 to vector<128x32xf32>
    %26 = arith.mulf %25, %22 : vector<128x32xf32>
    %27 = arith.select %24, %22, %26 : vector<128x32xi1>, vector<128x32xf32>
    %28 = arith.truncf %27 : vector<128x32xf32> to vector<128x32xbf16>
    %c0_19 = arith.constant 0 : index
    %c0_20 = arith.constant 0 : index
    %29 = vector.load %arg8[%c0_19, %c0_20] : memref<32x8xbf16, #tpu.memory_space<vmem>>, vector<32x8xbf16>
    %cst_21 = arith.constant dense<0.000000e+00> : vector<128x8xf32>
    %30 = tpu.matmul %28, %29, %cst_21 {dimension_numbers = #tpu.dot_dimension_numbers<[1], [0], [0], [1], [0, 0, 1, 1], [], []>} : vector<128x32xbf16>, vector<32x8xbf16>, vector<128x8xf32> -> vector<128x8xf32>
    %c0_22 = arith.constant 0 : index
    %c0_23 = arith.constant 0 : index
    %31 = vector.load %arg9[%c0_22, %c0_23] : memref<1x8xf32, #tpu.memory_space<vmem>>, vector<1x8xf32>
    %32 = vector.broadcast %31 : vector<1x8xf32> to vector<128x8xf32>
    %33 = arith.addf %30, %32 : vector<128x8xf32>
    %c0_24 = arith.constant 0 : index
    %c0_25 = arith.constant 0 : index
    %34 = vector.load %arg10[%c0_24, %c0_25] : memref<128x8xf32, #tpu.memory_space<vmem>>, vector<128x8xf32>
    tpu.vector_store %arg10[%c0_24, %c0_25], %33 {strides = array<i32>} : memref<128x8xf32, #tpu.memory_space<vmem>>, vector<128x8xf32>,
    return
  }
  func.func @transform_0(%arg0: i32) -> (i32, i32) {
    %c0_i32 = arith.constant 0 : i32
    %c0_i32_0 = arith.constant 0 : i32
    return %arg0, %c0_i32 : i32, i32
  }
  func.func @transform_1(%arg0: i32) -> (i32, i32) {
    %c0_i32 = arith.constant 0 : i32
    %c0_i32_0 = arith.constant 0 : i32
    return %arg0, %c0_i32 : i32, i32
  }
  func.func @transform_2(%arg0: i32) -> (i32, i32) {
    %c0_i32 = arith.constant 0 : i32
    %c0_i32_0 = arith.constant 0 : i32
    %c0_i32_1 = arith.constant 0 : i32
    return %c0_i32, %c0_i32_0 : i32, i32
  }
  func.func @transform_3(%arg0: i32) -> (i32, i32) {
    %c0_i32 = arith.constant 0 : i32
    %c0_i32_0 = arith.constant 0 : i32
    %c0_i32_1 = arith.constant 0 : i32
    return %c0_i32, %c0_i32_0 : i32, i32
  }
  func.func @transform_4(%arg0: i32) -> (i32, i32) {
    %c0_i32 = arith.constant 0 : i32
    %c0_i32_0 = arith.constant 0 : i32
    %c0_i32_1 = arith.constant 0 : i32
    return %c0_i32, %c0_i32_0 : i32, i32
  }
  func.func @transform_5(%arg0: i32) -> (i32, i32) {
    %c0_i32 = arith.constant 0 : i32
    %c0_i32_0 = arith.constant 0 : i32
    %c0_i32_1 = arith.constant 0 : i32
    return %c0_i32, %c0_i32_0 : i32, i32
  }
  func.func @transform_6(%arg0: i32) -> (i32, i32) {
    %c0_i32 = arith.constant 0 : i32
    %c0_i32_0 = arith.constant 0 : i32
    %c0_i32_1 = arith.constant 0 : i32
    return %c0_i32, %c0_i32_0 : i32, i32
  }
  func.func @transform_7(%arg0: i32) -> (i32, i32) {
    %c0_i32 = arith.constant 0 : i32
    %c0_i32_0 = arith.constant 0 : i32
    %c0_i32_1 = arith.constant 0 : i32
    return %c0_i32, %c0_i32_0 : i32, i32
  }
  func.func @transform_8(%arg0: i32) -> (i32, i32) {
    %c0_i32 = arith.constant 0 : i32
    %c0_i32_0 = arith.constant 0 : i32
    %c0_i32_1 = arith.constant 0 : i32
    return %c0_i32, %c0_i32_0 : i32, i32
  }
  func.func @transform_9(%arg0: i32) -> (i32, i32) {
    %c0_i32 = arith.constant 0 : i32
    %c0_i32_0 = arith.constant 0 : i32
    return %arg0, %c0_i32 : i32, i32
  }
}

</mosaic_0001>

<llo_original>
// kernel: tpu_custom_call.1
$region0: #{tpu_custom_call.1}
  #allocation0 [shape = 'u32[]', space=smem, size = 0x4, offset = 0x4, fixed_abs, tag = 'smem constant byte address 0x4 - core index']
  #allocation1 [shape = 'u32[144,128]{1,0:T(1,128)}', space=vmem, size = 0x12000, scoped, tag = 'internal scratch']
  %s0 = inlined_call_operand.vmem [shape: f32[256,16], index: 0, kind: input, shape index: {}]
  %s1 = inlined_call_operand.vmem [shape: f32[256,4], index: 1, kind: input, shape index: {}]
  %s2 = inlined_call_operand.vmem [shape: bf16[16,32], index: 2, kind: input, shape index: {}]
  %s3 = inlined_call_operand.vmem [shape: bf16[4,32], index: 3, kind: input, shape index: {}]
  %s4 = inlined_call_operand.vmem [shape: f32[1,32], index: 4, kind: input, shape index: {}]
  %s5 = inlined_call_operand.vmem [shape: bf16[32,32], index: 5, kind: input, shape index: {}]
  %s6 = inlined_call_operand.vmem [shape: f32[1,32], index: 6, kind: input, shape index: {}]
  %s7 = inlined_call_operand.vmem [shape: bf16[32,8], index: 7, kind: input, shape index: {}]
  %s8 = inlined_call_operand.vmem [shape: f32[1,8], index: 8, kind: input, shape index: {}]
  %s9 = inlined_call_operand.vmem [shape: f32[256,8], index: 9, kind: output, shape index: {}]
  %s10 = sld [smem:[#allocation0]]
  $region69: #{tpu_custom_call.1} parent=0
    _
  %s12 = ssub.s32 1, %s10
  %s13 = scalar_select 0, %s12, %s10
  loop: start=0, step=1, limit=4
  $region2: #{tpu_custom_call.1} parent=0 // loop_pre_header
    _
  $region3: #{tpu_custom_call.1} parent=0 // loop_header
    %s15 = sphi 0, %s19
    %p16 = scmp.ge.s32.totalorder %s15, 4
    %s25 = sphi 0, %s27
    %s28 = sphi 0, %s25
    %s29 = sphi 0, %s28
    %s45 = sphi 0, %s29
    %s51 = sphi 0, %s53
    %s54 = sphi 0, %s51
    %s55 = sphi 0, %s54
    %s71 = sphi 0, %s55
    %s75 = sphi 0, %s75
    %s77 = sphi 0, %s75
    %s78 = sphi 0, %s77
    %s92 = sphi 0, %s78
    %s96 = sphi 0, %s96
    %s98 = sphi 0, %s96
    %s99 = sphi 0, %s98
    %s113 = sphi 0, %s99
    %s117 = sphi 0, %s117
    %s119 = sphi 0, %s117
    %s120 = sphi 0, %s119
    %s134 = sphi 0, %s120
    %s138 = sphi 0, %s138
    %s140 = sphi 0, %s138
    %s141 = sphi 0, %s140
    %s155 = sphi 0, %s141
    %s159 = sphi 0, %s159
    %s161 = sphi 0, %s159
    %s162 = sphi 0, %s161
    %s176 = sphi 0, %s162
    %s180 = sphi 0, %s180
    %s182 = sphi 0, %s180
    %s183 = sphi 0, %s182
    %s197 = sphi 0, %s183
    %s201 = sphi 0, %s201
    %s203 = sphi 0, %s201
    %s204 = sphi 0, %s203
    %s218 = sphi 0, %s204
    %s224 = sphi 0, %s226
    %s227 = sphi 0, %s224
    %s228 = sphi 0, %s227
    %s244 = sphi 0, %s228
  $region4: #{tpu_custom_call.1} parent=0 // loop_header_branch
    %18 = sbr.rel (%p16) target = $region8
  $region5: #{tpu_custom_call.1} parent=0 // loop_body
    %s20 = ssub.s32 %s15, 1
    %s21 = ssub.s32 %s15, 2
    %s22 = sadd.s32 %s15, 1
    %s23 = ssub.s32 %s15, %s22
    %p24 = scmp.eq.s32.totalorder %s23, 0
    %s26 = sadd.s32 %s25, 1
    %s27 = scalar_select %p24, %s25, %s26
    %p30 = pneg %p24
    %p31 = scmp.eq.s32.totalorder %s15, 1
    %p32 = por %p30, %p31
    %p33 = scmp.ne.s32.totalorder %s25, %s28
    %p34 = scmp.eq.s32.totalorder %s15, 0
    %p35 = por %p33, %p34
    %p36 = scmp.ne.s32.totalorder %s25, %s28
    %p37 = scmp.eq.s32.totalorder %s20, 1
    %p38 = por %p36, %p37
    %p39 = scmp.ne.s32.totalorder %s28, %s29
    %p40 = scmp.eq.s32.totalorder %s20, 0
    %p41 = por %p39, %p40
    %p42 = scmp.ne.s32.totalorder %s28, %s29
    %p43 = scmp.eq.s32.totalorder %s21, 1
    %p44 = por %p42, %p43
    %p46 = scmp.ne.s32.totalorder %s29, %s45
    %p47 = scmp.eq.s32.totalorder %s21, 0
    %p48 = por %p46, %p47
    %s49 = ssub.s32 %s15, %s22
    %p50 = scmp.eq.s32.totalorder %s49, 0
    %s52 = sadd.s32 %s51, 1
    %s53 = scalar_select %p50, %s51, %s52
    %p56 = pneg %p50
    %p57 = scmp.eq.s32.totalorder %s15, 1
    %p58 = por %p56, %p57
    %p59 = scmp.ne.s32.totalorder %s51, %s54
    %p60 = scmp.eq.s32.totalorder %s15, 0
    %p61 = por %p59, %p60
    %p62 = scmp.ne.s32.totalorder %s51, %s54
    %p63 = scmp.eq.s32.totalorder %s20, 1
    %p64 = por %p62, %p63
    %p65 = scmp.ne.s32.totalorder %s54, %s55
    %p66 = scmp.eq.s32.totalorder %s20, 0
    %p67 = por %p65, %p66
    %p68 = scmp.ne.s32.totalorder %s54, %s55
    %p69 = scmp.eq.s32.totalorder %s21, 1
    %p70 = por %p68, %p69
    %p72 = scmp.ne.s32.totalorder %s55, %s71
    %p73 = scmp.eq.s32.totalorder %s21, 0
    %p74 = por %p72, %p73
    %s76 = sadd.s32 %s75, 1
    %p79 = scmp.eq.s32.totalorder %s15, 1
    %p80 = scmp.ne.s32.totalorder %s75, %s77
    %p81 = scmp.eq.s32.totalorder %s15, 0
    %p82 = por %p80, %p81
    %p83 = scmp.ne.s32.totalorder %s75, %s77
    %p84 = scmp.eq.s32.totalorder %s20, 1
    %p85 = por %p83, %p84
    %p86 = scmp.ne.s32.totalorder %s77, %s78
    %p87 = scmp.eq.s32.totalorder %s20, 0
    %p88 = por %p86, %p87
    %p89 = scmp.ne.s32.totalorder %s77, %s78
    %p90 = scmp.eq.s32.totalorder %s21, 1
    %p91 = por %p89, %p90
    %p93 = scmp.ne.s32.totalorder %s78, %s92
    %p94 = scmp.eq.s32.totalorder %s21, 0
    %p95 = por %p93, %p94
    %s97 = sadd.s32 %s96, 1
    %p100 = scmp.eq.s32.totalorder %s15, 1
    %p101 = scmp.ne.s32.totalorder %s96, %s98
    %p102 = scmp.eq.s32.totalorder %s15, 0
    %p103 = por %p101, %p102
    %p104 = scmp.ne.s32.totalorder %s96, %s98
    %p105 = scmp.eq.s32.totalorder %s20, 1
    %p106 = por %p104, %p105
    %p107 = scmp.ne.s32.totalorder %s98, %s99
    %p108 = scmp.eq.s32.totalorder %s20, 0
    %p109 = por %p107, %p108
    %p110 = scmp.ne.s32.totalorder %s98, %s99
    %p111 = scmp.eq.s32.totalorder %s21, 1
    %p112 = por %p110, %p111
    %p114 = scmp.ne.s32.totalorder %s99, %s113
    %p115 = scmp.eq.s32.totalorder %s21, 0
    %p116 = por %p114, %p115
    %s118 = sadd.s32 %s117, 1
    %p121 = scmp.eq.s32.totalorder %s15, 1
    %p122 = scmp.ne.s32.totalorder %s117, %s119
    %p123 = scmp.eq.s32.totalorder %s15, 0
    %p124 = por %p122, %p123
    %p125 = scmp.ne.s32.totalorder %s117, %s119
    %p126 = scmp.eq.s32.totalorder %s20, 1
    %p127 = por %p125, %p126
    %p128 = scmp.ne.s32.totalorder %s119, %s120
    %p129 = scmp.eq.s32.totalorder %s20, 0
    %p130 = por %p128, %p129
    %p131 = scmp.ne.s32.totalorder %s119, %s120
    %p132 = scmp.eq.s32.totalorder %s21, 1
    %p133 = por %p131, %p132
    %p135 = scmp.ne.s32.totalorder %s120, %s134
    %p136 = scmp.eq.s32.totalorder %s21, 0
    %p137 = por %p135, %p136
    %s139 = sadd.s32 %s138, 1
    %p142 = scmp.eq.s32.totalorder %s15, 1
    %p143 = scmp.ne.s32.totalorder %s138, %s140
    %p144 = scmp.eq.s32.totalorder %s15, 0
    %p145 = por %p143, %p144
    %p146 = scmp.ne.s32.totalorder %s138, %s140
    %p147 = scmp.eq.s32.totalorder %s20, 1
    %p148 = por %p146, %p147
    %p149 = scmp.ne.s32.totalorder %s140, %s141
    %p150 = scmp.eq.s32.totalorder %s20, 0
    %p151 = por %p149, %p150
    %p152 = scmp.ne.s32.totalorder %s140, %s141
    %p153 = scmp.eq.s32.totalorder %s21, 1
    %p154 = por %p152, %p153
    %p156 = scmp.ne.s32.totalorder %s141, %s155
    %p157 = scmp.eq.s32.totalorder %s21, 0
    %p158 = por %p156, %p157
    %s160 = sadd.s32 %s159, 1
    %p163 = scmp.eq.s32.totalorder %s15, 1
    %p164 = scmp.ne.s32.totalorder %s159, %s161
    %p165 = scmp.eq.s32.totalorder %s15, 0
    %p166 = por %p164, %p165
    %p167 = scmp.ne.s32.totalorder %s159, %s161
    %p168 = scmp.eq.s32.totalorder %s20, 1
    %p169 = por %p167, %p168
    %p170 = scmp.ne.s32.totalorder %s161, %s162
    %p171 = scmp.eq.s32.totalorder %s20, 0
    %p172 = por %p170, %p171
    %p173 = scmp.ne.s32.totalorder %s161, %s162
    %p174 = scmp.eq.s32.totalorder %s21, 1
    %p175 = por %p173, %p174
    %p177 = scmp.ne.s32.totalorder %s162, %s176
    %p178 = scmp.eq.s32.totalorder %s21, 0
    %p179 = por %p177, %p178
    %s181 = sadd.s32 %s180, 1
    %p184 = scmp.eq.s32.totalorder %s15, 1
    %p185 = scmp.ne.s32.totalorder %s180, %s182
    %p186 = scmp.eq.s32.totalorder %s15, 0
    %p187 = por %p185, %p186
    %p188 = scmp.ne.s32.totalorder %s180, %s182
    %p189 = scmp.eq.s32.totalorder %s20, 1
    %p190 = por %p188, %p189
    %p191 = scmp.ne.s32.totalorder %s182, %s183
    %p192 = scmp.eq.s32.totalorder %s20, 0
    %p193 = por %p191, %p192
    %p194 = scmp.ne.s32.totalorder %s182, %s183
    %p195 = scmp.eq.s32.totalorder %s21, 1
    %p196 = por %p194, %p195
    %p198 = scmp.ne.s32.totalorder %s183, %s197
    %p199 = scmp.eq.s32.totalorder %s21, 0
    %p200 = por %p198, %p199
    %s202 = sadd.s32 %s201, 1
    %p205 = scmp.eq.s32.totalorder %s15, 1
    %p206 = scmp.ne.s32.totalorder %s201, %s203
    %p207 = scmp.eq.s32.totalorder %s15, 0
    %p208 = por %p206, %p207
    %p209 = scmp.ne.s32.totalorder %s201, %s203
    %p210 = scmp.eq.s32.totalorder %s20, 1
    %p211 = por %p209, %p210
    %p212 = scmp.ne.s32.totalorder %s203, %s204
    %p213 = scmp.eq.s32.totalorder %s20, 0
    %p214 = por %p212, %p213
    %p215 = scmp.ne.s32.totalorder %s203, %s204
    %p216 = scmp.eq.s32.totalorder %s21, 1
    %p217 = por %p215, %p216
    %p219 = scmp.ne.s32.totalorder %s204, %s218
    %p220 = scmp.eq.s32.totalorder %s21, 0
    %p221 = por %p219, %p220
    %s222 = ssub.s32 %s15, %s22
    %p223 = scmp.eq.s32.totalorder %s222, 0
    %s225 = sadd.s32 %s224, 1
    %s226 = scalar_select %p223, %s224, %s225
    %p229 = pneg %p223
    %p230 = scmp.eq.s32.totalorder %s15, 1
    %p231 = por %p229, %p230
    %p232 = scmp.ne.s32.totalorder %s224, %s227
    %p233 = scmp.eq.s32.totalorder %s15, 0
    %p234 = por %p232, %p233
    %p235 = scmp.ne.s32.totalorder %s224, %s227
    %p236 = scmp.eq.s32.totalorder %s20, 1
    %p237 = por %p235, %p236
    %p238 = scmp.ne.s32.totalorder %s227, %s228
    %p239 = scmp.eq.s32.totalorder %s20, 0
    %p240 = por %p238, %p239
    %p241 = scmp.ne.s32.totalorder %s227, %s228
    %p242 = scmp.eq.s32.totalorder %s21, 1
    %p243 = por %p241, %p242
    %p245 = scmp.ne.s32.totalorder %s228, %s244
    %p246 = scmp.eq.s32.totalorder %s21, 0
    %p247 = por %p245, %p246
    %p248 = scmp.le.s32.totalorder 1, %s15
    %p249 = scmp.lt.s32.totalorder %s15, 3
    %p250 = pnand %p248, %p249
    %p251 = pneg %p250
    // Predicated region
    $region9: #{tpu_custom_call.1} parent=5 // pred_check
      _
    $region10: #{tpu_custom_call.1} parent=5 // pred_check_branch
      %253 = sbr.rel (%p250) target = $region12
    $region11: #{tpu_custom_call.1} parent=5 // pred_region
      %s254 = ssub.s32 %s15, 1
      // Predicated region
      $region13: #{tpu_custom_call.1} parent=11 // pred_check
        %p255 = pneg %p88
      $region14: #{tpu_custom_call.1} parent=11 // pred_check_branch
        %257 = sbr.rel (%p255) target = $region16
      $region15: #{tpu_custom_call.1} parent=11 // pred_region
        _
      $region16: #{tpu_custom_call.1} parent=11 // pred_fallthru
        _
      // Predicated region
      $region17: #{tpu_custom_call.1} parent=11 // pred_check
        %p258 = pneg %p109
      $region18: #{tpu_custom_call.1} parent=11 // pred_check_branch
        %260 = sbr.rel (%p258) target = $region20
      $region19: #{tpu_custom_call.1} parent=11 // pred_region
        _
      $region20: #{tpu_custom_call.1} parent=11 // pred_fallthru
        _
      // Predicated region
      $region21: #{tpu_custom_call.1} parent=11 // pred_check
        %p261 = pneg %p130
      $region22: #{tpu_custom_call.1} parent=11 // pred_check_branch
        %263 = sbr.rel (%p261) target = $region24
      $region23: #{tpu_custom_call.1} parent=11 // pred_region
        _
      $region24: #{tpu_custom_call.1} parent=11 // pred_fallthru
        _
      // Predicated region
      $region25: #{tpu_custom_call.1} parent=11 // pred_check
        %p264 = pneg %p151
      $region26: #{tpu_custom_call.1} parent=11 // pred_check_branch
        %266 = sbr.rel (%p264) target = $region28
      $region27: #{tpu_custom_call.1} parent=11 // pred_region
        _
      $region28: #{tpu_custom_call.1} parent=11 // pred_fallthru
        _
      // Predicated region
      $region29: #{tpu_custom_call.1} parent=11 // pred_check
        %p267 = pneg %p172
      $region30: #{tpu_custom_call.1} parent=11 // pred_check_branch
        %269 = sbr.rel (%p267) target = $region32
      $region31: #{tpu_custom_call.1} parent=11 // pred_region
        _
      $region32: #{tpu_custom_call.1} parent=11 // pred_fallthru
        _
      // Predicated region
      $region33: #{tpu_custom_call.1} parent=11 // pred_check
        %p270 = pneg %p193
      $region34: #{tpu_custom_call.1} parent=11 // pred_check_branch
        %272 = sbr.rel (%p270) target = $region36
      $region35: #{tpu_custom_call.1} parent=11 // pred_region
        _
      $region36: #{tpu_custom_call.1} parent=11 // pred_fallthru
        _
      // Predicated region
      $region37: #{tpu_custom_call.1} parent=11 // pred_check
        %p273 = pneg %p214
      $region38: #{tpu_custom_call.1} parent=11 // pred_check_branch
        %275 = sbr.rel (%p273) target = $region40
      $region39: #{tpu_custom_call.1} parent=11 // pred_region
        _
      $region40: #{tpu_custom_call.1} parent=11 // pred_fallthru
        _
    $region12: #{tpu_custom_call.1} parent=5 // pred_fallthru
      _
    %p276 = scmp.lt.s32.totalorder %s15, 2
    // Predicated region
    $region41: #{tpu_custom_call.1} parent=5 // pred_check
      %p277 = pneg %p276
    $region42: #{tpu_custom_call.1} parent=5 // pred_check_branch
      %279 = sbr.rel (%p277) target = $region44
    $region43: #{tpu_custom_call.1} parent=5 // pred_region
      // Predicated region
      $region45: #{tpu_custom_call.1} parent=43 // pred_check
        %p280 = pneg %p35
      $region46: #{tpu_custom_call.1} parent=43 // pred_check_branch
        %282 = sbr.rel (%p280) target = $region48
      $region47: #{tpu_custom_call.1} parent=43 // pred_region
        %s283 = smul.u32 16, %s15
        %p284 = scmp.lt.s32.totalorder %s283, 31
        %s285 = scalar_select %p284, %s283, 31
        %s286 = smul.addr %s285, 8
        %s287 = scalar_lea.vmem %s0, %s286
        %s288 = smul.u32 16, %s15
      $region48: #{tpu_custom_call.1} parent=43 // pred_fallthru
        _
      // Predicated region
      $region49: #{tpu_custom_call.1} parent=43 // pred_check
        %p289 = pneg %p61
      $region50: #{tpu_custom_call.1} parent=43 // pred_check_branch
        %291 = sbr.rel (%p289) target = $region52
      $region51: #{tpu_custom_call.1} parent=43 // pred_region
        %s292 = smul.u32 16, %s15
        %p293 = scmp.lt.s32.totalorder %s292, 31
        %s294 = scalar_select %p293, %s292, 31
        %s295 = smul.addr %s294, 8
        %s296 = scalar_lea.vmem %s1, %s295
        %s297 = smul.u32 16, %s15
      $region52: #{tpu_custom_call.1} parent=43 // pred_fallthru
        _
    $region44: #{tpu_custom_call.1} parent=5 // pred_fallthru
      _
    %p298 = scmp.le.s32.totalorder 1, %s15
    %p299 = scmp.lt.s32.totalorder %s15, 3
    %p300 = pnand %p298, %p299
    %p301 = pneg %p300
    // Predicated region
    $region53: #{tpu_custom_call.1} parent=5 // pred_check
      _
    $region54: #{tpu_custom_call.1} parent=5 // pred_check_branch
      %303 = sbr.rel (%p300) target = $region56
    $region55: #{tpu_custom_call.1} parent=5 // pred_region
      %s304 = ssub.s32 %s15, 1
      %s305 = smul.u32 16, %s20
      %p306 = scmp.lt.s32.totalorder %s305, 31
      %s307 = scalar_select %p306, %s305, 31
      %s308 = smul.addr %s307, 8
      %s309 = scalar_lea.vmem %s0, %s308
      %p310 = pneg %p41
      %p311 = pneg %p38
      %s312 = smul.u32 16, %s20
      %p313 = scmp.lt.s32.totalorder %s312, 31
      %s314 = scalar_select %p313, %s312, 31
      %s315 = smul.addr %s314, 8
      %s316 = scalar_lea.vmem %s1, %s315
      %p317 = pneg %p67
      %p318 = pneg %p64
      %p319 = pneg %p88
      %p320 = pneg %p85
      %p321 = pneg %p109
      %p322 = pneg %p106
      %p323 = pneg %p130
      %p324 = pneg %p127
      %p325 = pneg %p151
      %p326 = pneg %p148
      %p327 = pneg %p172
      %p328 = pneg %p169
      %p329 = pneg %p193
      %p330 = pneg %p190
      %p331 = pneg %p214
      %p332 = pneg %p211
      %p333 = pneg %p240
      %p334 = pneg %p237
      %s335 = smul.u32 16, %s20
      %p336 = scmp.lt.s32.totalorder %s335, 31
      %s337 = scalar_select %p336, %s335, 31
      %s338 = smul.addr %s337, 8
      %s339 = scalar_lea.vmem %s9, %s338
      %s340 = smul.u32 16, %s20
      %p341 = scmp.lt.s32.totalorder %s340, 31
      %s342 = scalar_select %p341, %s340, 31
      %s343 = smul.addr %s342, 8
      %s344 = scalar_lea.vmem %s0, %s343
      %s345 = smul.u32 16, %s20
      %s346 = smul.u32 16, %s20
      %p347 = scmp.lt.s32.totalorder %s346, 31
      %s348 = scalar_select %p347, %s346, 31
      %s349 = smul.addr %s348, 8
      %s350 = scalar_lea.vmem %s1, %s349
      %s351 = smul.u32 16, %s20
      %s352 = smul.u32 16, %s20
      %p353 = scmp.lt.s32.totalorder %s352, 31
      %s354 = scalar_select %p353, %s352, 31
      %s355 = smul.addr %s354, 8
      %s356 = scalar_lea.vmem %s9, %s355
      %s357 = smul.u32 16, %s20
      %v359 = vld [vmem:[%s344] sm:$0xff]
      %v360 = vld [vmem:[%s344 + $0x8] sm:$0xff]
      %v361 = vld [vmem:[%s344 + $0x10] sm:$0xff]
      %v362 = vld [vmem:[%s344 + $0x18] sm:$0xff]
      %v363 = vld [vmem:[%s344 + $0x20] sm:$0xff]
      %v364 = vld [vmem:[%s344 + $0x28] sm:$0xff]
      %v365 = vld [vmem:[%s344 + $0x30] sm:$0xff]
      %v366 = vld [vmem:[%s344 + $0x38] sm:$0xff]
      %v367 = vld [vmem:[%s344 + $0x40] sm:$0xff]
      %v368 = vld [vmem:[%s344 + $0x48] sm:$0xff]
      %v369 = vld [vmem:[%s344 + $0x50] sm:$0xff]
      %v370 = vld [vmem:[%s344 + $0x58] sm:$0xff]
      %v371 = vld [vmem:[%s344 + $0x60] sm:$0xff]
      %v372 = vld [vmem:[%s344 + $0x68] sm:$0xff]
      %v373 = vld [vmem:[%s344 + $0x70] sm:$0xff]
      %v374 = vld [vmem:[%s344 + $0x78] sm:$0xff]
      %v375 = vpack.c.bf16 %v360, %v359
      %v376 = vpack.c.bf16 %v362, %v361
      %v377 = vpack.c.bf16 %v364, %v363
      %v378 = vpack.c.bf16 %v366, %v365
      %v379 = vpack.c.bf16 %v368, %v367
      %v380 = vpack.c.bf16 %v370, %v369
      %v381 = vpack.c.bf16 %v372, %v371
      %v382 = vpack.c.bf16 %v374, %v373
      %v383 = vld [vmem:[%s2] sm:$0xf]
      %v384 = vld [vmem:[%s2 + $0x4] sm:$0xf]
      %v385 = vld [vmem:[%s350] sm:$0xff]
      %v386 = vld [vmem:[%s350 + $0x8] sm:$0xff]
      %v387 = vld [vmem:[%s350 + $0x10] sm:$0xff]
      %v388 = vld [vmem:[%s350 + $0x18] sm:$0xff]
      %v389 = vld [vmem:[%s350 + $0x20] sm:$0xff]
      %v390 = vld [vmem:[%s350 + $0x28] sm:$0xff]
      %v391 = vld [vmem:[%s350 + $0x30] sm:$0xff]
      %v392 = vld [vmem:[%s350 + $0x38] sm:$0xff]
      %v393 = vld [vmem:[%s350 + $0x40] sm:$0xff]
      %v394 = vld [vmem:[%s350 + $0x48] sm:$0xff]
      %v395 = vld [vmem:[%s350 + $0x50] sm:$0xff]
      %v396 = vld [vmem:[%s350 + $0x58] sm:$0xff]
      %v397 = vld [vmem:[%s350 + $0x60] sm:$0xff]
      %v398 = vld [vmem:[%s350 + $0x68] sm:$0xff]
      %v399 = vld [vmem:[%s350 + $0x70] sm:$0xff]
      %v400 = vld [vmem:[%s350 + $0x78] sm:$0xff]
      %v401 = vpack.c.bf16 %v386, %v385
      %v402 = vpack.c.bf16 %v388, %v387
      %v403 = vpack.c.bf16 %v390, %v389
      %v404 = vpack.c.bf16 %v392, %v391
      %v405 = vpack.c.bf16 %v394, %v393
      %v406 = vpack.c.bf16 %v396, %v395
      %v407 = vpack.c.bf16 %v398, %v397
      %v408 = vpack.c.bf16 %v400, %v399
      %v409 = vld [vmem:[%s3] sm:$0x3]
      %vm410 = vcmask 31744
      %v412 = vsel %vm410, %v401, 0
      %v415 = vsel %vm410, %v402, 0
      %v418 = vsel %vm410, %v403, 0
      %v421 = vsel %vm410, %v404, 0
      %v424 = vsel %vm410, %v405, 0
      %v427 = vsel %vm410, %v406, 0
      %v430 = vsel %vm410, %v407, 0
      %v433 = vsel %vm410, %v408, 0
      %vm435 = vcmask 1041408
      %v437 = vsel %vm435, %v409, 0
      %439 = vmatprep.subr.bf16.mxu0 0
      %440 = vmatpush1.bf16.msra.mxu0 0
      %441 = vmatprep.subr.bf16.mxu0 0
      %442 = vmatpush1.bf16.msra.mxu0 0
      %443 = vmatprep.subr.bf16.mxu0 0
      %444 = vmatpush1.bf16.msra.mxu0 0
      %445 = vmatprep.subr.bf16.mxu0 0
      %446 = vmatpush1.bf16.msra.mxu0 0
      %447 = vmatprep.subr.bf16.mxu0 0
      %448 = vmatpush1.bf16.msra.mxu0 0
      %449 = vmatprep.subr.bf16.mxu0 0
      %450 = vmatpush1.bf16.msra.mxu0 0
      %451 = vmatprep.subr.bf16.mxu0 0
      %452 = vmatpush1.bf16.msra.mxu0 0
      %453 = vmatprep.subr.bf16.mxu0 0
      %454 = vmatpush1.bf16.msra.mxu0 %v437
      %455 = vmatprep.subr.bf16.mxu0 0
      %456 = vmatpush2.bf16.msra.mxu0 0
      %457 = vmatprep.subr.bf16.mxu0 0
      %458 = vmatpush2.bf16.msra.mxu0 0
      %459 = vmatprep.subr.bf16.mxu0 0
      %460 = vmatpush2.bf16.msra.mxu0 0
      %461 = vmatprep.subr.bf16.mxu0 0
      %462 = vmatpush2.bf16.msra.mxu0 0
      %463 = vmatprep.subr.bf16.mxu0 0
      %464 = vmatpush2.bf16.msra.mxu0 0
      %465 = vmatprep.subr.bf16.mxu0 0
      %466 = vmatpush2.bf16.msra.mxu0 0
      %467 = vmatprep.subr.bf16.mxu0 0
      %468 = vmatpush2.bf16.msra.mxu0 0
      %469 = vmatprep.subr.bf16.mxu0 0
      %470 = vmatpush2.bf16.msra.mxu0 0
      %471 = vmatprep.mubr.bf16.mxu0 0
      %472 = vmatmul.mubr.bf16.gmra.mxu0 %v412
      %v473 = vpop.f32.mrf.mxu0
      %v474 = vadd.f32 0.0, %v473
      %v475 = vpop.f32.mrf.mxu0
      %v476 = vpop.f32.mrf.mxu0
      %v477 = vadd.f32 0.0, %v476
      %v478 = vpop.f32.mrf.mxu0
      %479 = vmatprep.mubr.bf16.mxu0 0
      %480 = vmatmul.mubr.bf16.gmra.mxu0 %v415
      %v481 = vpop.f32.mrf.mxu0
      %v482 = vadd.f32 0.0, %v481
      %v483 = vpop.f32.mrf.mxu0
      %v484 = vpop.f32.mrf.mxu0
      %v485 = vadd.f32 0.0, %v484
      %v486 = vpop.f32.mrf.mxu0
      %487 = vmatprep.mubr.bf16.mxu0 0
      %488 = vmatmul.mubr.bf16.gmra.mxu0 %v418
      %v489 = vpop.f32.mrf.mxu0
      %v490 = vadd.f32 0.0, %v489
      %v491 = vpop.f32.mrf.mxu0
      %v492 = vpop.f32.mrf.mxu0
      %v493 = vadd.f32 0.0, %v492
      %v494 = vpop.f32.mrf.mxu0
      %495 = vmatprep.mubr.bf16.mxu0 0
      %496 = vmatmul.mubr.bf16.gmra.mxu0 %v421
      %v497 = vpop.f32.mrf.mxu0
      %v498 = vadd.f32 0.0, %v497
      %v499 = vpop.f32.mrf.mxu0
      %v500 = vpop.f32.mrf.mxu0
      %v501 = vadd.f32 0.0, %v500
      %v502 = vpop.f32.mrf.mxu0
      %503 = vmatprep.mubr.bf16.mxu0 0
      %504 = vmatmul.mubr.bf16.gmra.mxu0 %v424
      %v505 = vpop.f32.mrf.mxu0
      %v506 = vadd.f32 0.0, %v505
      %v507 = vpop.f32.mrf.mxu0
      %v508 = vpop.f32.mrf.mxu0
      %v509 = vadd.f32 0.0, %v508
      %v510 = vpop.f32.mrf.mxu0
      %511 = vmatprep.mubr.bf16.mxu0 0
      %512 = vmatmul.mubr.bf16.gmra.mxu0 %v427
      %v513 = vpop.f32.mrf.mxu0
      %v514 = vadd.f32 0.0, %v513
      %v515 = vpop.f32.mrf.mxu0
      %v516 = vpop.f32.mrf.mxu0
      %v517 = vadd.f32 0.0, %v516
      %v518 = vpop.f32.mrf.mxu0
      %519 = vmatprep.mubr.bf16.mxu0 0
      %520 = vmatmul.mubr.bf16.gmra.mxu0 %v430
      %v521 = vpop.f32.mrf.mxu0
      %v522 = vadd.f32 0.0, %v521
      %v523 = vpop.f32.mrf.mxu0
      %v524 = vpop.f32.mrf.mxu0
      %v525 = vadd.f32 0.0, %v524
      %v526 = vpop.f32.mrf.mxu0
      %527 = vmatprep.mubr.bf16.mxu0 0
      %528 = vmatmul.mubr.bf16.gmra.mxu0 %v433
      %v529 = vpop.f32.mrf.mxu0
      %v530 = vadd.f32 0.0, %v529
      %v531 = vpop.f32.mrf.mxu0
      %v532 = vpop.f32.mrf.mxu0
      %v533 = vadd.f32 0.0, %v532
      %v534 = vpop.f32.mrf.mxu0
      %535 = vdwg.mxu0
      %v538 = vunpack.c.l.b16 %v383
      %v539 = vunpack.c.l.b16 %v384
      %v540 = vpack.c.b16 %v539, %v538
      %vm542 = vcmask 130048
      %v544 = vsel %vm542, %v375, 0
      %v547 = vsel %vm542, %v376, 0
      %v550 = vsel %vm542, %v377, 0
      %v553 = vsel %vm542, %v378, 0
      %v556 = vsel %vm542, %v379, 0
      %v559 = vsel %vm542, %v380, 0
      %v562 = vsel %vm542, %v381, 0
      %v565 = vsel %vm542, %v382, 0
      %567 = vmatprep.subr.bf16.mxu0 0
      %568 = vmatpush1.bf16.msra.mxu0 0
      %569 = vmatprep.subr.bf16.mxu0 0
      %570 = vmatpush1.bf16.msra.mxu0 0
      %571 = vmatprep.subr.bf16.mxu0 0
      %572 = vmatpush1.bf16.msra.mxu0 0
      %573 = vmatprep.subr.bf16.mxu0 0
      %574 = vmatpush1.bf16.msra.mxu0 0
      %575 = vmatprep.subr.bf16.mxu0 0
      %576 = vmatpush1.bf16.msra.mxu0 0
      %577 = vmatprep.subr.bf16.mxu0 0
      %578 = vmatpush1.bf16.msra.mxu0 0
      %579 = vmatprep.subr.bf16.mxu0 0
      %580 = vmatpush1.bf16.msra.mxu0 0
      %581 = vmatprep.subr.bf16.mxu0 0
      %582 = vmatpush1.bf16.msra.mxu0 %v540
      %583 = vmatprep.subr.bf16.mxu0 0
      %584 = vmatpush2.bf16.msra.mxu0 0
      %585 = vmatprep.subr.bf16.mxu0 0
      %586 = vmatpush2.bf16.msra.mxu0 0
      %587 = vmatprep.subr.bf16.mxu0 0
      %588 = vmatpush2.bf16.msra.mxu0 0
      %589 = vmatprep.subr.bf16.mxu0 0
      %590 = vmatpush2.bf16.msra.mxu0 0
      %591 = vmatprep.subr.bf16.mxu0 0
      %592 = vmatpush2.bf16.msra.mxu0 0
      %593 = vmatprep.subr.bf16.mxu0 0
      %594 = vmatpush2.bf16.msra.mxu0 0
      %595 = vmatprep.subr.bf16.mxu0 0
      %596 = vmatpush2.bf16.msra.mxu0 0
      %597 = vmatprep.subr.bf16.mxu0 0
      %598 = vmatpush2.bf16.msra.mxu0 0
      %599 = vmatprep.mubr.bf16.mxu0 0
      %600 = vmatmul.mubr.bf16.gmra.mxu0 %v544
      %v601 = vpop.f32.mrf.mxu0
      %v602 = vadd.f32 %v474, %v601
      %v603 = vpop.f32.mrf.mxu0
      %v604 = vpop.f32.mrf.mxu0
      %v605 = vadd.f32 %v477, %v604
      %v606 = vpop.f32.mrf.mxu0
      %607 = vmatprep.mubr.bf16.mxu0 0
      %608 = vmatmul.mubr.bf16.gmra.mxu0 %v547
      %v609 = vpop.f32.mrf.mxu0
      %v610 = vadd.f32 %v482, %v609
      %v611 = vpop.f32.mrf.mxu0
      %v612 = vpop.f32.mrf.mxu0
      %v613 = vadd.f32 %v485, %v612
      %v614 = vpop.f32.mrf.mxu0
      %615 = vmatprep.mubr.bf16.mxu0 0
      %616 = vmatmul.mubr.bf16.gmra.mxu0 %v550
      %v617 = vpop.f32.mrf.mxu0
      %v618 = vadd.f32 %v490, %v617
      %v619 = vpop.f32.mrf.mxu0
      %v620 = vpop.f32.mrf.mxu0
      %v621 = vadd.f32 %v493, %v620
      %v622 = vpop.f32.mrf.mxu0
      %623 = vmatprep.mubr.bf16.mxu0 0
      %624 = vmatmul.mubr.bf16.gmra.mxu0 %v553
      %v625 = vpop.f32.mrf.mxu0
      %v626 = vadd.f32 %v498, %v625
      %v627 = vpop.f32.mrf.mxu0
      %v628 = vpop.f32.mrf.mxu0
      %v629 = vadd.f32 %v501, %v628
      %v630 = vpop.f32.mrf.mxu0
      %631 = vmatprep.mubr.bf16.mxu0 0
      %632 = vmatmul.mubr.bf16.gmra.mxu0 %v556
      %v633 = vpop.f32.mrf.mxu0
      %v634 = vadd.f32 %v506, %v633
      %v635 = vpop.f32.mrf.mxu0
      %v636 = vpop.f32.mrf.mxu0
      %v637 = vadd.f32 %v509, %v636
      %v638 = vpop.f32.mrf.mxu0
      %639 = vmatprep.mubr.bf16.mxu0 0
      %640 = vmatmul.mubr.bf16.gmra.mxu0 %v559
      %v641 = vpop.f32.mrf.mxu0
      %v642 = vadd.f32 %v514, %v641
      %v643 = vpop.f32.mrf.mxu0
      %v644 = vpop.f32.mrf.mxu0
      %v645 = vadd.f32 %v517, %v644
      %v646 = vpop.f32.mrf.mxu0
      %647 = vmatprep.mubr.bf16.mxu0 0
      %648 = vmatmul.mubr.bf16.gmra.mxu0 %v562
      %v649 = vpop.f32.mrf.mxu0
      %v650 = vadd.f32 %v522, %v649
      %v651 = vpop.f32.mrf.mxu0
      %v652 = vpop.f32.mrf.mxu0
      %v653 = vadd.f32 %v525, %v652
      %v654 = vpop.f32.mrf.mxu0
      %655 = vmatprep.mubr.bf16.mxu0 0
      %656 = vmatmul.mubr.bf16.gmra.mxu0 %v565
      %v657 = vpop.f32.mrf.mxu0
      %v658 = vadd.f32 %v530, %v657
      %v659 = vpop.f32.mrf.mxu0
      %v660 = vpop.f32.mrf.mxu0
      %v661 = vadd.f32 %v533, %v660
      %v662 = vpop.f32.mrf.mxu0
      %663 = vdwg.mxu0
      %v664 = vld [vmem:[%s4] sm:$0x1]
      %v666 = vlaneseq
      %v667 = vshrl.u32 %v666, 7
      %v668 = vsub.s32 0, %v667
      %v669 = vrot.slane %v664, %v668
      %v671 = vadd.f32 %v602, %v669
      %v672 = vadd.f32 %v605, %v669
      %v673 = vadd.f32 %v610, %v669
      %v674 = vadd.f32 %v613, %v669
      %v675 = vadd.f32 %v618, %v669
      %v676 = vadd.f32 %v621, %v669
      %v677 = vadd.f32 %v626, %v669
      %v678 = vadd.f32 %v629, %v669
      %v679 = vadd.f32 %v634, %v669
      %v680 = vadd.f32 %v637, %v669
      %v681 = vadd.f32 %v642, %v669
      %v682 = vadd.f32 %v645, %v669
      %v683 = vadd.f32 %v650, %v669
      %v684 = vadd.f32 %v653, %v669
      %v685 = vadd.f32 %v658, %v669
      %v686 = vadd.f32 %v661, %v669
      %vm687 = vcmp.ge.f32.partialorder %v671, 0.0
      %vm688 = vcmp.ge.f32.partialorder %v672, 0.0
      %vm689 = vcmp.ge.f32.partialorder %v673, 0.0
      %vm690 = vcmp.ge.f32.partialorder %v674, 0.0
      %vm691 = vcmp.ge.f32.partialorder %v675, 0.0
      %vm692 = vcmp.ge.f32.partialorder %v676, 0.0
      %vm693 = vcmp.ge.f32.partialorder %v677, 0.0
      %vm694 = vcmp.ge.f32.partialorder %v678, 0.0
      %vm695 = vcmp.ge.f32.partialorder %v679, 0.0
      %vm696 = vcmp.ge.f32.partialorder %v680, 0.0
      %vm697 = vcmp.ge.f32.partialorder %v681, 0.0
      %vm698 = vcmp.ge.f32.partialorder %v682, 0.0
      %vm699 = vcmp.ge.f32.partialorder %v683, 0.0
      %vm700 = vcmp.ge.f32.partialorder %v684, 0.0
      %vm701 = vcmp.ge.f32.partialorder %v685, 0.0
      %vm702 = vcmp.ge.f32.partialorder %v686, 0.0
      %v703 = vmul.f32 %v671, 0.1
      %v704 = vmul.f32 %v672, 0.1
      %v705 = vmul.f32 %v673, 0.1
      %v706 = vmul.f32 %v674, 0.1
      %v707 = vmul.f32 %v675, 0.1
      %v708 = vmul.f32 %v676, 0.1
      %v709 = vmul.f32 %v677, 0.1
      %v710 = vmul.f32 %v678, 0.1
      %v711 = vmul.f32 %v679, 0.1
      %v712 = vmul.f32 %v680, 0.1
      %v713 = vmul.f32 %v681, 0.1
      %v714 = vmul.f32 %v682, 0.1
      %v715 = vmul.f32 %v683, 0.1
      %v716 = vmul.f32 %v684, 0.1
      %v717 = vmul.f32 %v685, 0.1
      %v718 = vmul.f32 %v686, 0.1
      %v719 = vsel %vm687, %v671, %v703
      %v720 = vsel %vm688, %v672, %v704
      %v721 = vsel %vm689, %v673, %v705
      %v722 = vsel %vm690, %v674, %v706
      %v723 = vsel %vm691, %v675, %v707
      %v724 = vsel %vm692, %v676, %v708
      %v725 = vsel %vm693, %v677, %v709
      %v726 = vsel %vm694, %v678, %v710
      %v727 = vsel %vm695, %v679, %v711
      %v728 = vsel %vm696, %v680, %v712
      %v729 = vsel %vm697, %v681, %v713
      %v730 = vsel %vm698, %v682, %v714
      %v731 = vsel %vm699, %v683, %v715
      %v732 = vsel %vm700, %v684, %v716
      %v733 = vsel %vm701, %v685, %v717
      %v734 = vsel %vm702, %v686, %v718
      %v735 = vpack.c.bf16 %v720, %v719
      %v736 = vpack.c.bf16 %v722, %v721
      %v737 = vpack.c.bf16 %v724, %v723
      %v738 = vpack.c.bf16 %v726, %v725
      %v739 = vpack.c.bf16 %v728, %v727
      %v740 = vpack.c.bf16 %v730, %v729
      %v741 = vpack.c.bf16 %v732, %v731
      %v742 = vpack.c.bf16 %v734, %v733
      %v743 = vld [vmem:[%s5] sm:$0xf]
      %v744 = vld [vmem:[%s5 + $0x4] sm:$0xf]
      %v745 = vld [vmem:[%s5 + $0x8] sm:$0xf]
      %v746 = vld [vmem:[%s5 + $0xc] sm:$0xf]
      %v747 = vld [vmem:[%s6] sm:$0x1]
      %v749 = vlaneseq
      %v750 = vshrl.u32 %v749, 7
      %v751 = vsub.s32 0, %v750
      %v752 = vrot.slane %v747, %v751
      %v758 = vunpack.c.l.b16 %v743
      %v759 = vunpack.c.l.b16 %v744
      %v760 = vunpack.c.l.b16 %v745
      %v761 = vunpack.c.l.b16 %v746
      %v762 = vpack.c.b16 %v759, %v758
      %v763 = vpack.c.b16 %v761, %v760
      %vm766 = vcmask 261120
      %v768 = vsel %vm766, %v735, 0
      %v771 = vsel %vm766, %v736, 0
      %v774 = vsel %vm766, %v737, 0
      %v777 = vsel %vm766, %v738, 0
      %v780 = vsel %vm766, %v739, 0
      %v783 = vsel %vm766, %v740, 0
      %v786 = vsel %vm766, %v741, 0
      %v789 = vsel %vm766, %v742, 0
      %791 = vmatprep.subr.bf16.mxu0 0
      %792 = vmatpush1.bf16.msra.mxu0 0
      %793 = vmatprep.subr.bf16.mxu0 0
      %794 = vmatpush1.bf16.msra.mxu0 0
      %795 = vmatprep.subr.bf16.mxu0 0
      %796 = vmatpush1.bf16.msra.mxu0 0
      %797 = vmatprep.subr.bf16.mxu0 0
      %798 = vmatpush1.bf16.msra.mxu0 0
      %799 = vmatprep.subr.bf16.mxu0 0
      %800 = vmatpush1.bf16.msra.mxu0 0
      %801 = vmatprep.subr.bf16.mxu0 0
      %802 = vmatpush1.bf16.msra.mxu0 0
      %803 = vmatprep.subr.bf16.mxu0 0
      %804 = vmatpush1.bf16.msra.mxu0 %v763
      %805 = vmatprep.subr.bf16.mxu0 0
      %806 = vmatpush1.bf16.msra.mxu0 %v762
      %807 = vmatprep.subr.bf16.mxu0 0
      %808 = vmatpush2.bf16.msra.mxu0 0
      %809 = vmatprep.subr.bf16.mxu0 0
      %810 = vmatpush2.bf16.msra.mxu0 0
      %811 = vmatprep.subr.bf16.mxu0 0
      %812 = vmatpush2.bf16.msra.mxu0 0
      %813 = vmatprep.subr.bf16.mxu0 0
      %814 = vmatpush2.bf16.msra.mxu0 0
      %815 = vmatprep.subr.bf16.mxu0 0
      %816 = vmatpush2.bf16.msra.mxu0 0
      %817 = vmatprep.subr.bf16.mxu0 0
      %818 = vmatpush2.bf16.msra.mxu0 0
      %819 = vmatprep.subr.bf16.mxu0 0
      %820 = vmatpush2.bf16.msra.mxu0 0
      %821 = vmatprep.subr.bf16.mxu0 0
      %822 = vmatpush2.bf16.msra.mxu0 0
      %823 = vmatprep.mubr.bf16.mxu0 0
      %824 = vmatmul.mubr.bf16.gmra.mxu0 %v768
      %v825 = vpop.f32.mrf.mxu0
      %v826 = vadd.f32 %v752, %v825
      %v827 = vpop.f32.mrf.mxu0
      %v828 = vpop.f32.mrf.mxu0
      %v829 = vadd.f32 %v752, %v828
      %v830 = vpop.f32.mrf.mxu0
      %831 = vmatprep.mubr.bf16.mxu0 0
      %832 = vmatmul.mubr.bf16.gmra.mxu0 %v771
      %v833 = vpop.f32.mrf.mxu0
      %v834 = vadd.f32 %v752, %v833
      %v835 = vpop.f32.mrf.mxu0
      %v836 = vpop.f32.mrf.mxu0
      %v837 = vadd.f32 %v752, %v836
      %v838 = vpop.f32.mrf.mxu0
      %839 = vmatprep.mubr.bf16.mxu0 0
      %840 = vmatmul.mubr.bf16.gmra.mxu0 %v774
      %v841 = vpop.f32.mrf.mxu0
      %v842 = vadd.f32 %v752, %v841
      %v843 = vpop.f32.mrf.mxu0
      %v844 = vpop.f32.mrf.mxu0
      %v845 = vadd.f32 %v752, %v844
      %v846 = vpop.f32.mrf.mxu0
      %847 = vmatprep.mubr.bf16.mxu0 0
      %848 = vmatmul.mubr.bf16.gmra.mxu0 %v777
      %v849 = vpop.f32.mrf.mxu0
      %v850 = vadd.f32 %v752, %v849
      %v851 = vpop.f32.mrf.mxu0
      %v852 = vpop.f32.mrf.mxu0
      %v853 = vadd.f32 %v752, %v852
      %v854 = vpop.f32.mrf.mxu0
      %855 = vmatprep.mubr.bf16.mxu0 0
      %856 = vmatmul.mubr.bf16.gmra.mxu0 %v780
      %v857 = vpop.f32.mrf.mxu0
      %v858 = vadd.f32 %v752, %v857
      %v859 = vpop.f32.mrf.mxu0
      %v860 = vpop.f32.mrf.mxu0
      %v861 = vadd.f32 %v752, %v860
      %v862 = vpop.f32.mrf.mxu0
      %863 = vmatprep.mubr.bf16.mxu0 0
      %864 = vmatmul.mubr.bf16.gmra.mxu0 %v783
      %v865 = vpop.f32.mrf.mxu0
      %v866 = vadd.f32 %v752, %v865
      %v867 = vpop.f32.mrf.mxu0
      %v868 = vpop.f32.mrf.mxu0
      %v869 = vadd.f32 %v752, %v868
      %v870 = vpop.f32.mrf.mxu0
      %871 = vmatprep.mubr.bf16.mxu0 0
      %872 = vmatmul.mubr.bf16.gmra.mxu0 %v786
      %v873 = vpop.f32.mrf.mxu0
      %v874 = vadd.f32 %v752, %v873
      %v875 = vpop.f32.mrf.mxu0
      %v876 = vpop.f32.mrf.mxu0
      %v877 = vadd.f32 %v752, %v876
      %v878 = vpop.f32.mrf.mxu0
      %879 = vmatprep.mubr.bf16.mxu0 0
      %880 = vmatmul.mubr.bf16.gmra.mxu0 %v789
      %v881 = vpop.f32.mrf.mxu0
      %v882 = vadd.f32 %v752, %v881
      %v883 = vpop.f32.mrf.mxu0
      %v884 = vpop.f32.mrf.mxu0
      %v885 = vadd.f32 %v752, %v884
      %v886 = vpop.f32.mrf.mxu0
      %887 = vdwg.mxu0
      %vm888 = vcmp.ge.f32.partialorder %v826, 0.0
      %vm889 = vcmp.ge.f32.partialorder %v829, 0.0
      %vm890 = vcmp.ge.f32.partialorder %v834, 0.0
      %vm891 = vcmp.ge.f32.partialorder %v837, 0.0
      %vm892 = vcmp.ge.f32.partialorder %v842, 0.0
      %vm893 = vcmp.ge.f32.partialorder %v845, 0.0
      %vm894 = vcmp.ge.f32.partialorder %v850, 0.0
      %vm895 = vcmp.ge.f32.partialorder %v853, 0.0
      %vm896 = vcmp.ge.f32.partialorder %v858, 0.0
      %vm897 = vcmp.ge.f32.partialorder %v861, 0.0
      %vm898 = vcmp.ge.f32.partialorder %v866, 0.0
      %vm899 = vcmp.ge.f32.partialorder %v869, 0.0
      %vm900 = vcmp.ge.f32.partialorder %v874, 0.0
      %vm901 = vcmp.ge.f32.partialorder %v877, 0.0
      %vm902 = vcmp.ge.f32.partialorder %v882, 0.0
      %vm903 = vcmp.ge.f32.partialorder %v885, 0.0
      %v904 = vmul.f32 %v826, 0.1
      %v905 = vmul.f32 %v829, 0.1
      %v906 = vmul.f32 %v834, 0.1
      %v907 = vmul.f32 %v837, 0.1
      %v908 = vmul.f32 %v842, 0.1
      %v909 = vmul.f32 %v845, 0.1
      %v910 = vmul.f32 %v850, 0.1
      %v911 = vmul.f32 %v853, 0.1
      %v912 = vmul.f32 %v858, 0.1
      %v913 = vmul.f32 %v861, 0.1
      %v914 = vmul.f32 %v866, 0.1
      %v915 = vmul.f32 %v869, 0.1
      %v916 = vmul.f32 %v874, 0.1
      %v917 = vmul.f32 %v877, 0.1
      %v918 = vmul.f32 %v882, 0.1
      %v919 = vmul.f32 %v885, 0.1
      %v920 = vsel %vm888, %v826, %v904
      %v921 = vsel %vm889, %v829, %v905
      %v922 = vsel %vm890, %v834, %v906
      %v923 = vsel %vm891, %v837, %v907
      %v924 = vsel %vm892, %v842, %v908
      %v925 = vsel %vm893, %v845, %v909
      %v926 = vsel %vm894, %v850, %v910
      %v927 = vsel %vm895, %v853, %v911
      %v928 = vsel %vm896, %v858, %v912
      %v929 = vsel %vm897, %v861, %v913
      %v930 = vsel %vm898, %v866, %v914
      %v931 = vsel %vm899, %v869, %v915
      %v932 = vsel %vm900, %v874, %v916
      %v933 = vsel %vm901, %v877, %v917
      %v934 = vsel %vm902, %v882, %v918
      %v935 = vsel %vm903, %v885, %v919
      %v936 = vpack.c.bf16 %v921, %v920
      %v937 = vpack.c.bf16 %v923, %v922
      %v938 = vpack.c.bf16 %v925, %v924
      %v939 = vpack.c.bf16 %v927, %v926
      %v940 = vpack.c.bf16 %v929, %v928
      %v941 = vpack.c.bf16 %v931, %v930
      %v942 = vpack.c.bf16 %v933, %v932
      %v943 = vpack.c.bf16 %v935, %v934
      %v944 = vld [vmem:[%s7] sm:$0xf]
      %v945 = vld [vmem:[%s7 + $0x4] sm:$0xf]
      %v946 = vld [vmem:[%s7 + $0x8] sm:$0xf]
      %v947 = vld [vmem:[%s7 + $0xc] sm:$0xf]
      %v948 = vld [vmem:[%s8] sm:$0x1]
      %v950 = vlaneseq
      %v951 = vshrl.u32 %v950, 7
      %v952 = vsub.s32 0, %v951
      %v953 = vrot.slane %v948, %v952
      %v959 = vunpack.c.l.b16 %v944
      %v960 = vunpack.c.l.b16 %v945
      %v961 = vunpack.c.l.b16 %v946
      %v962 = vunpack.c.l.b16 %v947
      %v963 = vpack.c.b16 %v960, %v959
      %v964 = vpack.c.b16 %v962, %v961
      %v968 = vsel %vm766, %v936, 0
      %v971 = vsel %vm766, %v937, 0
      %v974 = vsel %vm766, %v938, 0
      %v977 = vsel %vm766, %v939, 0
      %v980 = vsel %vm766, %v940, 0
      %v983 = vsel %vm766, %v941, 0
      %v986 = vsel %vm766, %v942, 0
      %v989 = vsel %vm766, %v943, 0
      %991 = vmatprep.subr.bf16.mxu0 0
      %992 = vmatpush1.bf16.msra.mxu0 0
      %993 = vmatprep.subr.bf16.mxu0 0
      %994 = vmatpush1.bf16.msra.mxu0 0
      %995 = vmatprep.subr.bf16.mxu0 0
      %996 = vmatpush1.bf16.msra.mxu0 0
      %997 = vmatprep.subr.bf16.mxu0 0
      %998 = vmatpush1.bf16.msra.mxu0 0
      %999 = vmatprep.subr.bf16.mxu0 0
      %1000 = vmatpush1.bf16.msra.mxu0 0
      %1001 = vmatprep.subr.bf16.mxu0 0
      %1002 = vmatpush1.bf16.msra.mxu0 0
      %1003 = vmatprep.subr.bf16.mxu0 0
      %1004 = vmatpush1.bf16.msra.mxu0 %v964
      %1005 = vmatprep.subr.bf16.mxu0 0
      %1006 = vmatpush1.bf16.msra.mxu0 %v963
      %1007 = vmatprep.subr.bf16.mxu0 0
      %1008 = vmatpush2.bf16.msra.mxu0 0
      %1009 = vmatprep.subr.bf16.mxu0 0
      %1010 = vmatpush2.bf16.msra.mxu0 0
      %1011 = vmatprep.subr.bf16.mxu0 0
      %1012 = vmatpush2.bf16.msra.mxu0 0
      %1013 = vmatprep.subr.bf16.mxu0 0
      %1014 = vmatpush2.bf16.msra.mxu0 0
      %1015 = vmatprep.subr.bf16.mxu0 0
      %1016 = vmatpush2.bf16.msra.mxu0 0
      %1017 = vmatprep.subr.bf16.mxu0 0
      %1018 = vmatpush2.bf16.msra.mxu0 0
      %1019 = vmatprep.subr.bf16.mxu0 0
      %1020 = vmatpush2.bf16.msra.mxu0 0
      %1021 = vmatprep.subr.bf16.mxu0 0
      %1022 = vmatpush2.bf16.msra.mxu0 0
      %1023 = vmatprep.mubr.bf16.mxu0 0
      %1024 = vmatmul.mubr.bf16.gmra.mxu0 %v968
      %v1025 = vpop.f32.mrf.mxu0
      %v1026 = vadd.f32 %v953, %v1025
      %v1027 = vpop.f32.mrf.mxu0
      %v1028 = vpop.f32.mrf.mxu0
      %v1029 = vadd.f32 %v953, %v1028
      %v1030 = vpop.f32.mrf.mxu0
      %1031 = vmatprep.mubr.bf16.mxu0 0
      %1032 = vmatmul.mubr.bf16.gmra.mxu0 %v971
      %v1033 = vpop.f32.mrf.mxu0
      %v1034 = vadd.f32 %v953, %v1033
      %v1035 = vpop.f32.mrf.mxu0
      %v1036 = vpop.f32.mrf.mxu0
      %v1037 = vadd.f32 %v953, %v1036
      %v1038 = vpop.f32.mrf.mxu0
      %1039 = vmatprep.mubr.bf16.mxu0 0
      %1040 = vmatmul.mubr.bf16.gmra.mxu0 %v974
      %v1041 = vpop.f32.mrf.mxu0
      %v1042 = vadd.f32 %v953, %v1041
      %v1043 = vpop.f32.mrf.mxu0
      %v1044 = vpop.f32.mrf.mxu0
      %v1045 = vadd.f32 %v953, %v1044
      %v1046 = vpop.f32.mrf.mxu0
      %1047 = vmatprep.mubr.bf16.mxu0 0
      %1048 = vmatmul.mubr.bf16.gmra.mxu0 %v977
      %v1049 = vpop.f32.mrf.mxu0
      %v1050 = vadd.f32 %v953, %v1049
      %v1051 = vpop.f32.mrf.mxu0
      %v1052 = vpop.f32.mrf.mxu0
      %v1053 = vadd.f32 %v953, %v1052
      %v1054 = vpop.f32.mrf.mxu0
      %1055 = vmatprep.mubr.bf16.mxu0 0
      %1056 = vmatmul.mubr.bf16.gmra.mxu0 %v980
      %v1057 = vpop.f32.mrf.mxu0
      %v1058 = vadd.f32 %v953, %v1057
      %v1059 = vpop.f32.mrf.mxu0
      %v1060 = vpop.f32.mrf.mxu0
      %v1061 = vadd.f32 %v953, %v1060
      %v1062 = vpop.f32.mrf.mxu0
      %1063 = vmatprep.mubr.bf16.mxu0 0
      %1064 = vmatmul.mubr.bf16.gmra.mxu0 %v983
      %v1065 = vpop.f32.mrf.mxu0
      %v1066 = vadd.f32 %v953, %v1065
      %v1067 = vpop.f32.mrf.mxu0
      %v1068 = vpop.f32.mrf.mxu0
      %v1069 = vadd.f32 %v953, %v1068
      %v1070 = vpop.f32.mrf.mxu0
      %1071 = vmatprep.mubr.bf16.mxu0 0
      %1072 = vmatmul.mubr.bf16.gmra.mxu0 %v986
      %v1073 = vpop.f32.mrf.mxu0
      %v1074 = vadd.f32 %v953, %v1073
      %v1075 = vpop.f32.mrf.mxu0
      %v1076 = vpop.f32.mrf.mxu0
      %v1077 = vadd.f32 %v953, %v1076
      %v1078 = vpop.f32.mrf.mxu0
      %1079 = vmatprep.mubr.bf16.mxu0 0
      %1080 = vmatmul.mubr.bf16.gmra.mxu0 %v989
      %v1081 = vpop.f32.mrf.mxu0
      %v1082 = vadd.f32 %v953, %v1081
      %v1083 = vpop.f32.mrf.mxu0
      %v1084 = vpop.f32.mrf.mxu0
      %v1085 = vadd.f32 %v953, %v1084
      %v1086 = vpop.f32.mrf.mxu0
      %1087 = vdwg.mxu0
      %vm1088 = vcmask 64512
      %1089 = vst.msk [vmem:[%s356] sm:$0xff] %vm1088, %v1026
      %1090 = vst.msk [vmem:[%s356 + $0x8] sm:$0xff] %vm1088, %v1029
      %1091 = vst.msk [vmem:[%s356 + $0x10] sm:$0xff] %vm1088, %v1034
      %1092 = vst.msk [vmem:[%s356 + $0x18] sm:$0xff] %vm1088, %v1037
      %1093 = vst.msk [vmem:[%s356 + $0x20] sm:$0xff] %vm1088, %v1042
      %1094 = vst.msk [vmem:[%s356 + $0x28] sm:$0xff] %vm1088, %v1045
      %1095 = vst.msk [vmem:[%s356 + $0x30] sm:$0xff] %vm1088, %v1050
      %1096 = vst.msk [vmem:[%s356 + $0x38] sm:$0xff] %vm1088, %v1053
      %1097 = vst.msk [vmem:[%s356 + $0x40] sm:$0xff] %vm1088, %v1058
      %1098 = vst.msk [vmem:[%s356 + $0x48] sm:$0xff] %vm1088, %v1061
      %1099 = vst.msk [vmem:[%s356 + $0x50] sm:$0xff] %vm1088, %v1066
      %1100 = vst.msk [vmem:[%s356 + $0x58] sm:$0xff] %vm1088, %v1069
      %1101 = vst.msk [vmem:[%s356 + $0x60] sm:$0xff] %vm1088, %v1074
      %1102 = vst.msk [vmem:[%s356 + $0x68] sm:$0xff] %vm1088, %v1077
      %1103 = vst.msk [vmem:[%s356 + $0x70] sm:$0xff] %vm1088, %v1082
      %1104 = vst.msk [vmem:[%s356 + $0x78] sm:$0xff] %vm1088, %v1085
      %s1105 = smul.u32 16, %s20
      %p1106 = scmp.lt.s32.totalorder %s1105, 31
      %s1107 = scalar_select %p1106, %s1105, 31
      %s1108 = smul.addr %s1107, 8
      %s1109 = scalar_lea.vmem %s9, %s1108
      // Predicated region
      $region57: #{tpu_custom_call.1} parent=55 // pred_check
        %p1110 = pneg %p237
      $region58: #{tpu_custom_call.1} parent=55 // pred_check_branch
        %1112 = sbr.rel (%p1110) target = $region60
      $region59: #{tpu_custom_call.1} parent=55 // pred_region
        %s1113 = smul.u32 16, %s20
      $region60: #{tpu_custom_call.1} parent=55 // pred_fallthru
        _
    $region56: #{tpu_custom_call.1} parent=5 // pred_fallthru
      _
    %p1114 = scmp.le.s32.totalorder 2, %s15
    // Predicated region
    $region61: #{tpu_custom_call.1} parent=5 // pred_check
      %p1115 = pneg %p1114
    $region62: #{tpu_custom_call.1} parent=5 // pred_check_branch
      %1117 = sbr.rel (%p1115) target = $region64
    $region63: #{tpu_custom_call.1} parent=5 // pred_region
      %s1118 = ssub.s32 %s15, 2
      // Predicated region
      $region65: #{tpu_custom_call.1} parent=63 // pred_check
        %p1119 = pneg %p243
      $region66: #{tpu_custom_call.1} parent=63 // pred_check_branch
        %1121 = sbr.rel (%p1119) target = $region68
      $region67: #{tpu_custom_call.1} parent=63 // pred_region
        %s1122 = smul.u32 16, %s21
        %p1123 = scmp.lt.s32.totalorder %s1122, 31
        %s1124 = scalar_select %p1123, %s1122, 31
        %s1125 = smul.addr %s1124, 8
        %s1126 = scalar_lea.vmem %s9, %s1125
      $region68: #{tpu_custom_call.1} parent=63 // pred_fallthru
        _
    $region64: #{tpu_custom_call.1} parent=5 // pred_fallthru
      _
  $region6: #{tpu_custom_call.1} parent=0 // loop_footer
    %s19 = sadd.s32 1, %s15
  $region7: #{tpu_custom_call.1} parent=0 // loop_footer_branch
    %14 = sbr.rel target = $region3
  $region8: #{tpu_custom_call.1} parent=0 // loop_exit
    _

</llo_original>
